<compile_context>
chip_gen: v6e
topology: v6e:2x2x1
jax: 0.10.0
libtpu: 0.0.40
codegen_flags: <defaults>
</compile_context>

<pallas_src>
import functools

import jax
import jax.numpy as jnp
from jax.experimental import pallas as pl
from jax.experimental.pallas import tpu as pltpu


# ---------------------------------------------------------------------------
# Kernels
# ---------------------------------------------------------------------------

def _norm_kernel(*refs, eps, inv_len, subtract_last, affine):
    """mode == 'norm': stats over L and normalize one (TB, L, TC) tile."""
    if affine:
        x_ref, w_ref, b_ref, y_ref, ctr_ref, std_ref = refs
    else:
        x_ref, y_ref, ctr_ref, std_ref = refs
        w_ref = b_ref = None

    x = x_ref[...].astype(jnp.float32)                        # (TB, L, TC)

    # Per-(batch, channel) statistics over the sequence axis (sublane reduce).
    mean = jnp.sum(x, axis=1, keepdims=True) * inv_len        # (TB, 1, TC)
    xc = x - mean
    var = jnp.sum(xc * xc, axis=1, keepdims=True) * inv_len   # unbiased=False
    var_eps = var + eps
    stdev = jnp.sqrt(var_eps)
    inv_std = jax.lax.rsqrt(var_eps)                          # EUP rsqrt

    center = x[:, -1:, :] if subtract_last else mean          # (TB, 1, TC)

    # Fold everything into one FMA per element.
    scale = inv_std                                           # (TB, 1, TC)
    shift = -center * inv_std
    if affine:
        w = w_ref[...].astype(jnp.float32)                    # (1, TC) -> bcast
        b = b_ref[...].astype(jnp.float32)
        scale = scale * w
        shift = shift * w + b

    y_ref[...] = (x * scale + shift).astype(y_ref.dtype)
    ctr_ref[...] = center.astype(ctr_ref.dtype)
    std_ref[...] = stdev.astype(std_ref.dtype)


def _denorm_kernel(*refs, eps, affine):
    """mode == 'denorm': invert the normalization on one (TB, L, TC) tile."""
    if affine:
        x_ref, ctr_ref, std_ref, w_ref, b_ref, y_ref = refs
    else:
        x_ref, ctr_ref, std_ref, y_ref = refs
        w_ref = b_ref = None

    x = x_ref[...].astype(jnp.float32)                        # (TB, L, TC)
    std = std_ref[...].astype(jnp.float32)                    # (TB, 1, TC)
    ctr = ctr_ref[...].astype(jnp.float32)

    if affine:
        # Per-channel scale/shift once per tile; single FMA per element below.
        inv_w = 1.0 / (w_ref[...].astype(jnp.float32) + eps * eps)   # (1, TC)
        scale = std * inv_w
        shift = ctr - b_ref[...].astype(jnp.float32) * scale
    else:
        scale = std
        shift = ctr

    y_ref[...] = (x * scale + shift).astype(y_ref.dtype)


# ---------------------------------------------------------------------------
# Tile selection
# ---------------------------------------------------------------------------

def _pick_tiles(B, L, C, itemsize, target_bytes=2 << 20):
    """Pick (TB, TC) so a (TB, L, TC) block is ~target_bytes and grid has >=2 steps."""
    # Channel tile: 128-multiple divisor of C when possible, else full C.
    if C > 128 and C % 128 == 0:
        tc = 128
        d = 128
        while d <= C:
            if C % d == 0 and L * d * itemsize <= target_bytes:
                tc = d
            d += 128
    else:
        tc = C

    row_bytes = max(1, L * tc * itemsize)

    # Batch tile: largest divisor of B whose block fits the budget.
    tb = 1
    for d in range(B, 0, -1):
        if B % d == 0 and d * row_bytes <= target_bytes:
            tb = d
            break

    # Megacore guard: keep at least 2 grid steps when possible (v7x: 2 TCs).
    if (B // tb) * (C // tc) < 2:
        if B > 1:
            for d in range(B // 2, 0, -1):
                if B % d == 0:
                    tb = d
                    break
        elif tc > 128 and C % 128 == 0:
            for d in range(tc - 128, 127, -128):
                if C % d == 0:
                    tc = d
                    break
    return tb, tc


def _vmem_limit(tb, L, tc):
    # double-buffered in/out blocks + f32 upcast temporaries, with headroom.
    f32_tile = tb * L * tc * 4
    return int(min(48 << 20, max(32 << 20, 8 * f32_tile)))


# ---------------------------------------------------------------------------
# pallas_call wrappers
# ---------------------------------------------------------------------------

def _normalize_fwd(x, *, eps, subtract_last, affine, weight=None, bias=None):
    """Returns (y, center, stdev); center/stdev are float32 with shape (B, 1, C)."""
    B, L, C = x.shape
    tb, tc = _pick_tiles(B, L, C, jnp.dtype(x.dtype).itemsize)
    grid = (B // tb, C // tc)

    kern = functools.partial(
        _norm_kernel, eps=float(eps), inv_len=1.0 / float(L),
        subtract_last=bool(subtract_last), affine=bool(affine))

    in_specs = [pl.BlockSpec((tb, L, tc), lambda b, c: (b, 0, c))]
    args = [x]
    if affine:
        in_specs += [pl.BlockSpec((1, tc), lambda b, c: (0, c)),
                     pl.BlockSpec((1, tc), lambda b, c: (0, c))]
        args += [jnp.asarray(weight, jnp.float32).reshape(1, C),
                 jnp.asarray(bias, jnp.float32).reshape(1, C)]

    out_shape = (jax.ShapeDtypeStruct((B, L, C), x.dtype),
                 jax.ShapeDtypeStruct((B, 1, C), jnp.float32),
                 jax.ShapeDtypeStruct((B, 1, C), jnp.float32))
    out_specs = (pl.BlockSpec((tb, L, tc), lambda b, c: (b, 0, c)),
                 pl.BlockSpec((tb, 1, tc), lambda b, c: (b, 0, c)),
                 pl.BlockSpec((tb, 1, tc), lambda b, c: (b, 0, c)))

    return pl.pallas_call(
        kern,
        out_shape=out_shape,
        grid=grid,
        in_specs=in_specs,
        out_specs=out_specs,
        compiler_params=pltpu.CompilerParams(
            dimension_semantics=("parallel", "parallel"),
            vmem_limit_bytes=_vmem_limit(tb, L, tc)),
    )(*args)


def _normalize_inv(x, center, stdev, *, eps, affine, weight=None, bias=None):
    B, L, C = x.shape
    tb, tc = _pick_tiles(B, L, C, jnp.dtype(x.dtype).itemsize)
    grid = (B // tb, C // tc)

    kern = functools.partial(_denorm_kernel, eps=float(eps), affine=bool(affine))

    in_specs = [pl.BlockSpec((tb, L, tc), lambda b, c: (b, 0, c)),
                pl.BlockSpec((tb, 1, tc), lambda b, c: (b, 0, c)),
                pl.BlockSpec((tb, 1, tc), lambda b, c: (b, 0, c))]
    args = [x, center, stdev]
    if affine:
        in_specs += [pl.BlockSpec((1, tc), lambda b, c: (0, c)),
                     pl.BlockSpec((1, tc), lambda b, c: (0, c))]
        args += [jnp.asarray(weight, jnp.float32).reshape(1, C),
                 jnp.asarray(bias, jnp.float32).reshape(1, C)]

    return pl.pallas_call(
        kern,
        out_shape=jax.ShapeDtypeStruct((B, L, C), x.dtype),
        grid=grid,
        in_specs=in_specs,
        out_specs=pl.BlockSpec((tb, L, tc), lambda b, c: (b, 0, c)),
        compiler_params=pltpu.CompilerParams(
            dimension_semantics=("parallel", "parallel"),
            vmem_limit_bytes=_vmem_limit(tb, L, tc)),
    )(*args)


# ---------------------------------------------------------------------------
# Module-level wrapper mirroring the PyTorch Normalize forward
# ---------------------------------------------------------------------------

class Normalize:
    def __init__(self, num_features, eps=1e-5, affine=False,
                 subtract_last=False, non_norm=False):
        self.num_features = num_features
        self.eps = eps
        self.affine = affine
        self.subtract_last = subtract_last
        self.non_norm = non_norm
        if self.affine:
            self.affine_weight = jnp.ones((num_features,), jnp.float32)
            self.affine_bias = jnp.zeros((num_features,), jnp.float32)
        else:
            self.affine_weight = None
            self.affine_bias = None
        self.mean = None    # stored center (mean or last), float32 (B, 1, C)
        self.stdev = None   # stored stdev,                 float32 (B, 1, C)

    def __call__(self, x, mode):
        # TODO(synk): inputs with ndim > 3 (extra middle dims) are not handled;
        # the TimeMixer model always calls this with [B, L, C].
        assert x.ndim == 3, "Normalize kernel expects [batch, seq_len, channels]"
        if mode == 'norm':
            y, center, stdev = _normalize_fwd(
                x, eps=self.eps, subtract_last=self.subtract_last,
                affine=self.affine, weight=self.affine_weight,
                bias=self.affine_bias)
            self.mean, self.stdev = center, stdev
            if self.non_norm:
                return x
            return y
        elif mode == 'denorm':
            if self.non_norm:
                return x
            return _normalize_inv(
                x, self.mean, self.stdev, eps=self.eps, affine=self.affine,
                weight=self.affine_weight, bias=self.affine_bias)
        else:
            raise NotImplementedError(mode)


# ---------------------------------------------------------------------------
# Pure-JAX references (mirror the PyTorch module exactly)
# ---------------------------------------------------------------------------

def _ref_norm(x, eps, subtract_last=False, weight=None, bias=None):
    xf = x.astype(jnp.float32)
    mean = jnp.mean(xf, axis=1, keepdims=True)
    stdev = jnp.sqrt(jnp.var(xf, axis=1, keepdims=True) + eps)  # unbiased=False
    center = xf[:, -1:, :] if subtract_last else mean
    y = (xf - center) / stdev
    if weight is not None:
        y = y * weight + bias
    return y.astype(x.dtype), center, stdev


def _ref_denorm(y, center, stdev, eps, weight=None, bias=None, out_dtype=jnp.float32):
    yf = y.astype(jnp.float32)
    if weight is not None:
        yf = (yf - bias) / (weight + eps * eps)
    return (yf * stdev + center).astype(out_dtype)


# ---------------------------------------------------------------------------
# Tests
# ---------------------------------------------------------------------------

if __name__ == "__main__":
    key = jax.random.PRNGKey(0)
    atol = 1e-4

    # Test 1: default config (affine=False, subtract_last=False), small shape.
    B, L, C = 2, 32, 8
    k1, k2, k3, k4, k5 = jax.random.split(key, 5)
    x = jax.random.normal(k1, (B, L, C), dtype=jnp.float32)

    model = Normalize(num_features=C, eps=1e-5)
    y = model(x, 'norm')
    x_rec = model(y, 'denorm')
    jax.block_until_ready((y, x_rec))

    y_ref, ctr_ref, std_ref = _ref_norm(x, model.eps)
    assert jnp.allclose(y, y_ref, atol=atol, rtol=atol)
    assert jnp.allclose(model.mean, ctr_ref, atol=atol, rtol=atol)
    assert jnp.allclose(model.stdev, std_ref, atol=atol, rtol=atol)
    assert jnp.allclose(x_rec, x, atol=atol, rtol=atol)

    # Test 2: lane-dense channel count + batch tiling (C-tiling grid axis).
    B2, L2, C2 = 4, 64, 256
    x2 = jax.random.normal(k2, (B2, L2, C2), dtype=jnp.float32)
    model2 = Normalize(num_features=C2, eps=1e-5)
    y2 = model2(x2, 'norm')
    x2_rec = model2(y2, 'denorm')
    jax.block_until_ready((y2, x2_rec))
    y2_ref, _, _ = _ref_norm(x2, model2.eps)
    assert jnp.allclose(y2, y2_ref, atol=atol, rtol=atol)
    assert jnp.allclose(x2_rec, x2, atol=atol, rtol=atol)

    # Test 3: affine=True + subtract_last=True.
    model3 = Normalize(num_features=C, eps=1e-5, affine=True, subtract_last=True)
    w = jax.random.uniform(k3, (C,), minval=0.5, maxval=1.5, dtype=jnp.float32)
    b = jax.random.normal(k4, (C,), dtype=jnp.float32)
    model3.affine_weight, model3.affine_bias = w, b

    y3 = model3(x, 'norm')
    x3_rec = model3(y3, 'denorm')
    jax.block_until_ready((y3, x3_rec))

    y3_ref, ctr3_ref, std3_ref = _ref_norm(
        x, model3.eps, subtract_last=True, weight=w, bias=b)
    x3_rec_ref = _ref_denorm(y3_ref, ctr3_ref, std3_ref, model3.eps,
                             weight=w, bias=b)
    assert jnp.allclose(y3, y3_ref, atol=atol, rtol=atol)
    assert jnp.allclose(x3_rec, x3_rec_ref, atol=atol, rtol=atol)

    # Test 4: bfloat16 input (f32 stats / f32 affine params kept in-kernel).
    B4, L4, C4 = 2, 48, 16
    x4 = jax.random.normal(k5, (B4, L4, C4), dtype=jnp.float32).astype(jnp.bfloat16)
    model4 = Normalize(num_features=C4, eps=1e-5)
    y4 = model4(x4, 'norm')
    x4_rec = model4(y4, 'denorm')
    jax.block_until_ready((y4, x4_rec))
    y4_ref, _, _ = _ref_norm(x4, model4.eps)
    assert jnp.allclose(y4.astype(jnp.float32), y4_ref.astype(jnp.float32),
                        atol=2e-2, rtol=2e-2)
    assert jnp.allclose(x4_rec.astype(jnp.float32), x4.astype(jnp.float32),
                        atol=2e-2, rtol=2e-2)

    print("KERNEL_OK")
</pallas_src>

<mosaic_0001>
module attributes {stable_mosaic.version = 11 : i64} {
  func.func @_norm_kernel(%arg0: i32, %arg1: i32, %arg2: memref<1x32x8xf32, #tpu.memory_space<vmem>>, %arg3: memref<1x32x8xf32, #tpu.memory_space<vmem>>, %arg4: memref<1x1x8xf32, #tpu.memory_space<vmem>>, %arg5: memref<1x1x8xf32, #tpu.memory_space<vmem>>) attributes {dimension_semantics = [#tpu.dimension_semantics<parallel>, #tpu.dimension_semantics<parallel>], iteration_bounds = array<i64: 2, 1>, scalar_prefetch = 0 : i64, scratch_operands = 0 : i64, tpu.core_type = #tpu.core_type<tc>, window_params = [{transform_indices = @transform_0, window_bounds = array<i64: 1, 32, 8>}, {transform_indices = @transform_1, window_bounds = array<i64: 1, 32, 8>}, {transform_indices = @transform_2, window_bounds = array<i64: 1, 1, 8>}, {transform_indices = @transform_3, window_bounds = array<i64: 1, 1, 8>}]} {
    %c0 = arith.constant 0 : index
    %c0_0 = arith.constant 0 : index
    %c0_1 = arith.constant 0 : index
    %0 = vector.load %arg2[%c0, %c0_0, %c0_1] : memref<1x32x8xf32, #tpu.memory_space<vmem>>, vector<1x32x8xf32>
    %cst = arith.constant dense<0.000000e+00> : vector<1x8xf32>
    %1 = vector.multi_reduction <add>, %0, %cst [1] : vector<1x32x8xf32> to vector<1x8xf32>
    %2 = vector.shape_cast %1 : vector<1x8xf32> to vector<1x1x8xf32>
    %cst_2 = arith.constant 3.125000e-02 : f32
    %3 = vector.broadcast %cst_2 : f32 to vector<1x1x8xf32>
    %4 = arith.mulf %2, %3 : vector<1x1x8xf32>
    %5 = vector.broadcast %4 : vector<1x1x8xf32> to vector<1x32x8xf32>
    %6 = arith.subf %0, %5 : vector<1x32x8xf32>
    %7 = arith.mulf %6, %6 : vector<1x32x8xf32>
    %cst_3 = arith.constant dense<0.000000e+00> : vector<1x8xf32>
    %8 = vector.multi_reduction <add>, %7, %cst_3 [1] : vector<1x32x8xf32> to vector<1x8xf32>
    %9 = vector.shape_cast %8 : vector<1x8xf32> to vector<1x1x8xf32>
    %cst_4 = arith.constant 3.125000e-02 : f32
    %10 = vector.broadcast %cst_4 : f32 to vector<1x1x8xf32>
    %11 = arith.mulf %9, %10 : vector<1x1x8xf32>
    %cst_5 = arith.constant 9.99999974E-6 : f32
    %12 = vector.broadcast %cst_5 : f32 to vector<1x1x8xf32>
    %13 = arith.addf %11, %12 : vector<1x1x8xf32>
    %14 = math.sqrt %13 : vector<1x1x8xf32>
    %15 = math.rsqrt %13 : vector<1x1x8xf32>
    %cst_6 = arith.constant 0.000000e+00 : f32
    %16 = vector.broadcast %cst_6 : f32 to vector<1x1x8xf32>
    %17 = arith.subf %16, %4 : vector<1x1x8xf32>
    %18 = arith.mulf %17, %15 : vector<1x1x8xf32>
    %19 = vector.broadcast %15 : vector<1x1x8xf32> to vector<1x32x8xf32>
    %20 = arith.mulf %0, %19 : vector<1x32x8xf32>
    %21 = vector.broadcast %18 : vector<1x1x8xf32> to vector<1x32x8xf32>
    %22 = arith.addf %20, %21 : vector<1x32x8xf32>
    %c0_7 = arith.constant 0 : index
    %c0_8 = arith.constant 0 : index
    %c0_9 = arith.constant 0 : index
    %23 = vector.load %arg3[%c0_7, %c0_8, %c0_9] : memref<1x32x8xf32, #tpu.memory_space<vmem>>, vector<1x32x8xf32>
    tpu.vector_store %arg3[%c0_7, %c0_8, %c0_9], %22 {strides = array<i32>} : memref<1x32x8xf32, #tpu.memory_space<vmem>>, vector<1x32x8xf32>,
    %c0_10 = arith.constant 0 : index
    %c0_11 = arith.constant 0 : index
    %c0_12 = arith.constant 0 : index
    %24 = vector.load %arg4[%c0_10, %c0_11, %c0_12] : memref<1x1x8xf32, #tpu.memory_space<vmem>>, vector<1x1x8xf32>
    tpu.vector_store %arg4[%c0_10, %c0_11, %c0_12], %4 {strides = array<i32>} : memref<1x1x8xf32, #tpu.memory_space<vmem>>, vector<1x1x8xf32>,
    %c0_13 = arith.constant 0 : index
    %c0_14 = arith.constant 0 : index
    %c0_15 = arith.constant 0 : index
    %25 = vector.load %arg5[%c0_13, %c0_14, %c0_15] : memref<1x1x8xf32, #tpu.memory_space<vmem>>, vector<1x1x8xf32>
    tpu.vector_store %arg5[%c0_13, %c0_14, %c0_15], %14 {strides = array<i32>} : memref<1x1x8xf32, #tpu.memory_space<vmem>>, vector<1x1x8xf32>,
    return
  }
  func.func @transform_0(%arg0: i32, %arg1: i32) -> (i32, i32, i32) {
    %c0_i32 = arith.constant 0 : i32
    %c0_i32_0 = arith.constant 0 : i32
    return %arg0, %c0_i32, %arg1 : i32, i32, i32
  }
  func.func @transform_1(%arg0: i32, %arg1: i32) -> (i32, i32, i32) {
    %c0_i32 = arith.constant 0 : i32
    %c0_i32_0 = arith.constant 0 : i32
    return %arg0, %c0_i32, %arg1 : i32, i32, i32
  }
  func.func @transform_2(%arg0: i32, %arg1: i32) -> (i32, i32, i32) {
    %c0_i32 = arith.constant 0 : i32
    %c0_i32_0 = arith.constant 0 : i32
    return %arg0, %c0_i32, %arg1 : i32, i32, i32
  }
  func.func @transform_3(%arg0: i32, %arg1: i32) -> (i32, i32, i32) {
    %c0_i32 = arith.constant 0 : i32
    %c0_i32_0 = arith.constant 0 : i32
    return %arg0, %c0_i32, %arg1 : i32, i32, i32
  }
}

</mosaic_0001>

<llo_original>
// kernel: tpu_custom_call.1
$region0: #{tpu_custom_call.1}
  #allocation0 [shape = 'u32[]', space=smem, size = 0x4, offset = 0x4, fixed_abs, tag = 'smem constant byte address 0x4 - core index']
  #allocation1 [shape = 'u32[144,128]{1,0:T(1,128)}', space=vmem, size = 0x12000, scoped, tag = 'internal scratch']
  %s0 = inlined_call_operand.vmem [shape: f32[2,32,8], index: 0, kind: input, shape index: {}]
  %s1 = inlined_call_operand.vmem [shape: f32[2,32,8], index: 1, kind: output, shape index: {0}]
  %s2 = inlined_call_operand.hbm [shape: f32[2,1,8], index: 2, kind: output, shape index: {1}]
  %s3 = inlined_call_operand.hbm [shape: f32[2,1,8], index: 3, kind: output, shape index: {2}]
  %4 = xla_tuple %s1, %s2, %s3
  %s5 = sld [smem:[#allocation0]]
  $region53: #{tpu_custom_call.1} parent=0
    _
  %s7 = ssub.s32 1, %s5
  %s8 = scalar_select 0, %s7, %s5
  $region1: #{tpu_custom_call.1} parent=0
    #allocation2 [shape = 'u8[1024]{0}', space=vmem, size = 0x400, scoped, tag = 'output window, operand 1']
    #allocation3 [shape = 's32[2]{0}', space=sflag, size = 0x8, scoped, tag = 'scoped memory for tpu_custom_call.1']
    #allocation4 [shape = 'u8[1024]{0}', space=vmem, size = 0x400, scoped, tag = 'output window, operand 2']
    #allocation5 [shape = 's32[2]{0}', space=sflag, size = 0x8, scoped, tag = 'scoped memory for tpu_custom_call.1']
    %9 = vsyncpa [#allocation3], 0
    %s10 = scalar_lea.sflag [#allocation3], 1
    %11 = vsyncpa %s10, 0
    %12 = vsyncpa [#allocation5], 0
    %s13 = scalar_lea.sflag [#allocation5], 1
    %14 = vsyncpa %s13, 0
    loop: start=0, step=1, limit=4
    $region2: #{tpu_custom_call.1} parent=1 // loop_pre_header
      _
    $region3: #{tpu_custom_call.1} parent=1 // loop_header
      %s16 = sphi 0, %s20
      %p17 = scmp.ge.s32.totalorder %s16, 4
      %s23 = sphi 0, %s35
      %s24 = sphi 0, %s31
      %s25 = sphi 0, %s23
      %s26 = sphi 0, %s24
      %s27 = sphi 0, %s25
      %s28 = sphi 0, %s26
      %s40 = sphi 0, %s42
      %s43 = sphi 0, %s40
      %s44 = sphi 0, %s43
      %s60 = sphi 0, %s44
      %s68 = sphi 0, %s70
      %s71 = sphi 0, %s68
      %s72 = sphi 0, %s71
      %s88 = sphi 0, %s72
      %s96 = sphi 0, %s98
      %s99 = sphi 0, %s96
      %s100 = sphi 0, %s99
      %s116 = sphi 0, %s100
      %s124 = sphi 0, %s126
      %s127 = sphi 0, %s124
      %s128 = sphi 0, %s127
      %s144 = sphi 0, %s128
    $region4: #{tpu_custom_call.1} parent=1 // loop_header_branch
      %19 = sbr.rel (%p17) target = $region8
    $region5: #{tpu_custom_call.1} parent=1 // loop_body
      %s21 = ssub.s32 %s16, 1
      %s22 = ssub.s32 %s16, 2
      %s29 = sadd.s32 1, %s24
      %p30 = scmp.ge.s32.totalorder %s29, 1
      %s31 = scalar_select %p30, 0, %s29
      %s32 = sadd.s32 1, %s23
      %s33 = scalar_select %p30, %s32, %s23
      %p34 = scmp.ge.s32.totalorder %s33, 2
      %s35 = scalar_select %p34, 0, %s33
      %s36 = ssub.s32 %s23, %s35
      %s37 = ssub.s32 %s24, %s31
      %s38 = sor.u32 %s36, %s37
      %p39 = scmp.eq.s32.totalorder %s38, 0
      %s41 = sadd.s32 %s40, 1
      %s42 = scalar_select %p39, %s40, %s41
      %p45 = pneg %p39
      %p46 = scmp.eq.s32.totalorder %s16, 1
      %p47 = por %p45, %p46
      %p48 = scmp.ne.s32.totalorder %s40, %s43
      %p49 = scmp.eq.s32.totalorder %s16, 0
      %p50 = por %p48, %p49
      %p51 = scmp.ne.s32.totalorder %s40, %s43
      %p52 = scmp.eq.s32.totalorder %s21, 1
      %p53 = por %p51, %p52
      %p54 = scmp.ne.s32.totalorder %s43, %s44
      %p55 = scmp.eq.s32.totalorder %s21, 0
      %p56 = por %p54, %p55
      %p57 = scmp.ne.s32.totalorder %s43, %s44
      %p58 = scmp.eq.s32.totalorder %s22, 1
      %p59 = por %p57, %p58
      %p61 = scmp.ne.s32.totalorder %s44, %s60
      %p62 = scmp.eq.s32.totalorder %s22, 0
      %p63 = por %p61, %p62
      %s64 = ssub.s32 %s23, %s35
      %s65 = ssub.s32 %s24, %s31
      %s66 = sor.u32 %s64, %s65
      %p67 = scmp.eq.s32.totalorder %s66, 0
      %s69 = sadd.s32 %s68, 1
      %s70 = scalar_select %p67, %s68, %s69
      %p73 = pneg %p67
      %p74 = scmp.eq.s32.totalorder %s16, 1
      %p75 = por %p73, %p74
      %p76 = scmp.ne.s32.totalorder %s68, %s71
      %p77 = scmp.eq.s32.totalorder %s16, 0
      %p78 = por %p76, %p77
      %p79 = scmp.ne.s32.totalorder %s68, %s71
      %p80 = scmp.eq.s32.totalorder %s21, 1
      %p81 = por %p79, %p80
      %p82 = scmp.ne.s32.totalorder %s71, %s72
      %p83 = scmp.eq.s32.totalorder %s21, 0
      %p84 = por %p82, %p83
      %p85 = scmp.ne.s32.totalorder %s71, %s72
      %p86 = scmp.eq.s32.totalorder %s22, 1
      %p87 = por %p85, %p86
      %p89 = scmp.ne.s32.totalorder %s72, %s88
      %p90 = scmp.eq.s32.totalorder %s22, 0
      %p91 = por %p89, %p90
      %s92 = ssub.s32 %s23, %s35
      %s93 = ssub.s32 %s24, %s31
      %s94 = sor.u32 %s92, %s93
      %p95 = scmp.eq.s32.totalorder %s94, 0
      %s97 = sadd.s32 %s96, 1
      %s98 = scalar_select %p95, %s96, %s97
      %p101 = pneg %p95
      %p102 = scmp.eq.s32.totalorder %s16, 1
      %p103 = por %p101, %p102
      %p104 = scmp.ne.s32.totalorder %s96, %s99
      %p105 = scmp.eq.s32.totalorder %s16, 0
      %p106 = por %p104, %p105
      %p107 = scmp.ne.s32.totalorder %s96, %s99
      %p108 = scmp.eq.s32.totalorder %s21, 1
      %p109 = por %p107, %p108
      %p110 = scmp.ne.s32.totalorder %s99, %s100
      %p111 = scmp.eq.s32.totalorder %s21, 0
      %p112 = por %p110, %p111
      %p113 = scmp.ne.s32.totalorder %s99, %s100
      %p114 = scmp.eq.s32.totalorder %s22, 1
      %p115 = por %p113, %p114
      %p117 = scmp.ne.s32.totalorder %s100, %s116
      %p118 = scmp.eq.s32.totalorder %s22, 0
      %p119 = por %p117, %p118
      %s120 = ssub.s32 %s23, %s35
      %s121 = ssub.s32 %s24, %s31
      %s122 = sor.u32 %s120, %s121
      %p123 = scmp.eq.s32.totalorder %s122, 0
      %s125 = sadd.s32 %s124, 1
      %s126 = scalar_select %p123, %s124, %s125
      %p129 = pneg %p123
      %p130 = scmp.eq.s32.totalorder %s16, 1
      %p131 = por %p129, %p130
      %p132 = scmp.ne.s32.totalorder %s124, %s127
      %p133 = scmp.eq.s32.totalorder %s16, 0
      %p134 = por %p132, %p133
      %p135 = scmp.ne.s32.totalorder %s124, %s127
      %p136 = scmp.eq.s32.totalorder %s21, 1
      %p137 = por %p135, %p136
      %p138 = scmp.ne.s32.totalorder %s127, %s128
      %p139 = scmp.eq.s32.totalorder %s21, 0
      %p140 = por %p138, %p139
      %p141 = scmp.ne.s32.totalorder %s127, %s128
      %p142 = scmp.eq.s32.totalorder %s22, 1
      %p143 = por %p141, %p142
      %p145 = scmp.ne.s32.totalorder %s128, %s144
      %p146 = scmp.eq.s32.totalorder %s22, 0
      %p147 = por %p145, %p146
      %p148 = scmp.le.s32.totalorder 1, %s16
      %p149 = scmp.lt.s32.totalorder %s16, 3
      %p150 = pnand %p148, %p149
      %p151 = pneg %p150
      // Predicated region
      $region9: #{tpu_custom_call.1} parent=5 // pred_check
        _
      $region10: #{tpu_custom_call.1} parent=5 // pred_check_branch
        %153 = sbr.rel (%p150) target = $region12
      $region11: #{tpu_custom_call.1} parent=5 // pred_region
        %s154 = ssub.s32 %s16, 1
      $region12: #{tpu_custom_call.1} parent=5 // pred_fallthru
        _
      %p155 = scmp.lt.s32.totalorder %s16, 2
      // Predicated region
      $region13: #{tpu_custom_call.1} parent=5 // pred_check
        %p156 = pneg %p155
      $region14: #{tpu_custom_call.1} parent=5 // pred_check_branch
        %158 = sbr.rel (%p156) target = $region16
      $region15: #{tpu_custom_call.1} parent=5 // pred_region
        // Predicated region
        $region17: #{tpu_custom_call.1} parent=15 // pred_check
          %p159 = pneg %p50
        $region18: #{tpu_custom_call.1} parent=15 // pred_check_branch
          %161 = sbr.rel (%p159) target = $region20
        $region19: #{tpu_custom_call.1} parent=15 // pred_region
          %p162 = scmp.lt.s32.totalorder %s23, 1
          %s163 = scalar_select %p162, %s23, 1
          %p164 = scmp.lt.s32.totalorder %s24, 0
          %s165 = scalar_select %p164, %s24, 0
          %s166 = smul.addr %s163, 4
          %s167 = sadd.s32 %s165, %s166
          %s168 = smul.addr %s167, 8
          %s169 = scalar_lea.vmem %s0, %s168
        $region20: #{tpu_custom_call.1} parent=15 // pred_fallthru
          _
      $region16: #{tpu_custom_call.1} parent=5 // pred_fallthru
        _
      %p170 = scmp.le.s32.totalorder 1, %s16
      %p171 = scmp.lt.s32.totalorder %s16, 3
      %p172 = pnand %p170, %p171
      %p173 = pneg %p172
      // Predicated region
      $region21: #{tpu_custom_call.1} parent=5 // pred_check
        _
      $region22: #{tpu_custom_call.1} parent=5 // pred_check_branch
        %175 = sbr.rel (%p172) target = $region24
      $region23: #{tpu_custom_call.1} parent=5 // pred_region
        %s176 = ssub.s32 %s16, 1
        %p177 = scmp.lt.s32.totalorder %s25, 1
        %s178 = scalar_select %p177, %s25, 1
        %p179 = scmp.lt.s32.totalorder %s26, 0
        %s180 = scalar_select %p179, %s26, 0
        %s181 = smul.addr %s178, 4
        %s182 = sadd.s32 %s180, %s181
        %s183 = smul.addr %s182, 8
        %s184 = scalar_lea.vmem %s0, %s183
        %p185 = pneg %p56
        %p186 = pneg %p53
        %p187 = pneg %p84
        %p188 = pneg %p81
        %p189 = scmp.lt.s32.totalorder %s25, 1
        %s190 = scalar_select %p189, %s25, 1
        %p191 = scmp.lt.s32.totalorder %s26, 0
        %s192 = scalar_select %p191, %s26, 0
        %s193 = smul.addr %s190, 4
        %s194 = sadd.s32 %s192, %s193
        %s195 = smul.addr %s194, 8
        %s196 = scalar_lea.vmem %s1, %s195
        %p197 = pneg %p112
        %p198 = pneg %p109
        %s199 = sand.u32 %s99, 1
        %s200 = scalar_lea.sflag [#allocation3], %s199
        %s201 = sand.u32 %s99, 1
        %s202 = scalar_lea.vmem [#allocation2], %s201
        %p203 = pneg %p140
        %p204 = pneg %p137
        %s205 = sand.u32 %s127, 1
        %s206 = scalar_lea.sflag [#allocation5], %s205
        %s207 = sand.u32 %s127, 1
        %s208 = scalar_lea.vmem [#allocation4], %s207
        %p209 = scmp.lt.s32.totalorder %s25, 1
        %s210 = scalar_select %p209, %s25, 1
        %p211 = scmp.lt.s32.totalorder %s26, 0
        %s212 = scalar_select %p211, %s26, 0
        %s213 = smul.addr %s210, 4
        %s214 = sadd.s32 %s212, %s213
        %s215 = smul.addr %s214, 8
        %s216 = scalar_lea.vmem %s0, %s215
        %p217 = scmp.lt.s32.totalorder %s25, 1
        %s218 = scalar_select %p217, %s25, 1
        %p219 = scmp.lt.s32.totalorder %s26, 0
        %s220 = scalar_select %p219, %s26, 0
        %s221 = smul.addr %s218, 4
        %s222 = sadd.s32 %s220, %s221
        %s223 = smul.addr %s222, 8
        %s224 = scalar_lea.vmem %s1, %s223
        %v225 = vld [vmem:[%s216] sm:$0xff]
        %v226 = vld [vmem:[%s216 + $0x8] sm:$0xff]
        %v227 = vld [vmem:[%s216 + $0x10] sm:$0xff]
        %v228 = vld [vmem:[%s216 + $0x18] sm:$0xff]
        %vm229 = vcmask 64512
        %v230 = vsel %vm229, %v225, 0.0
        %v231 = vsel %vm229, %v226, 0.0
        %v232 = vadd.f32 %v230, %v231
        %v233 = vsel %vm229, %v227, 0.0
        %v234 = vadd.f32 %v232, %v233
        %v235 = vsel %vm229, %v228, 0.0
        %v236 = vadd.f32 %v234, %v235
        %v237 = vrot.slane %v236, 4
        %v238 = vadd.f32 %v236, %v237
        %v239 = vrot.slane %v238, 2
        %v240 = vadd.f32 %v238, %v239
        %v241 = vrot.slane %v240, 1
        %v242 = vadd.f32 %v240, %v241
        %v243 = vmul.f32 %v242, 0.03125
        %v244 = vsub.f32 %v225, %v243
        %v245 = vsub.f32 %v226, %v243
        %v246 = vsub.f32 %v227, %v243
        %v247 = vsub.f32 %v228, %v243
        %v248 = vmul.f32 %v244, %v244
        %v249 = vmul.f32 %v245, %v245
        %v250 = vmul.f32 %v246, %v246
        %v251 = vmul.f32 %v247, %v247
        %v252 = vsel %vm229, %v248, 0.0
        %v253 = vsel %vm229, %v249, 0.0
        %v254 = vadd.f32 %v252, %v253
        %v255 = vsel %vm229, %v250, 0.0
        %v256 = vadd.f32 %v254, %v255
        %v257 = vsel %vm229, %v251, 0.0
        %v258 = vadd.f32 %v256, %v257
        %v259 = vrot.slane %v258, 4
        %v260 = vadd.f32 %v258, %v259
        %v261 = vrot.slane %v260, 2
        %v262 = vadd.f32 %v260, %v261
        %v263 = vrot.slane %v262, 1
        %v264 = vadd.f32 %v262, %v263
        %v265 = vmul.f32 %v264, 0.03125
        %v266 = vadd.f32 %v265, 1e-05
        %v267 = vrsqrt.pop %v266
        %v268 = vmul.f32 %v266, %v267
        %vm269 = vcmp.eq.f32.partialorder %v266, inf
        %v270 = vsel %vm269, %v266, %v268
        %vm271 = vcmp.eq.f32.partialorder %v266, 0.0
        %v272 = vand.u32 %v266, 2147483648
        %v273 = vsel %vm271, %v272, %v270
        %v274 = vrsqrt.pop %v266
        %v275 = vsub.f32 0.0, %v243
        %v276 = vmul.f32 %v275, %v274
        %v277 = vmul.f32 %v225, %v274
        %v278 = vmul.f32 %v226, %v274
        %v279 = vmul.f32 %v227, %v274
        %v280 = vmul.f32 %v228, %v274
        %v281 = vadd.f32 %v277, %v276
        %v282 = vadd.f32 %v278, %v276
        %v283 = vadd.f32 %v279, %v276
        %v284 = vadd.f32 %v280, %v276
        %285 = vst.msk [vmem:[%s224] sm:$0xff] %vm229, %v281
        %286 = vst.msk [vmem:[%s224 + $0x8] sm:$0xff] %vm229, %v282
        %287 = vst.msk [vmem:[%s224 + $0x10] sm:$0xff] %vm229, %v283
        %288 = vst.msk [vmem:[%s224 + $0x18] sm:$0xff] %vm229, %v284
        %vm289 = vcmask 57344
        %290 = vst.msk [vmem:[%s202] sm:$0x1] %vm289, %v243
        %291 = vst.msk [vmem:[%s208] sm:$0x1] %vm289, %v273
        %p292 = scmp.lt.s32.totalorder %s25, 1
        %s293 = scalar_select %p292, %s25, 1
        %p294 = scmp.lt.s32.totalorder %s26, 0
        %s295 = scalar_select %p294, %s26, 0
        %s296 = smul.addr %s293, 4
        %s297 = sadd.s32 %s295, %s296
        %s298 = smul.addr %s297, 8
        %s299 = scalar_lea.vmem %s1, %s298
        %s300 = sand.u32 %s99, 1
        %s301 = scalar_lea.sflag [#allocation3], %s300
        %s302 = sand.u32 %s99, 1
        %s303 = scalar_lea.vmem [#allocation2], %s302
        %s304 = sand.u32 %s127, 1
        %s305 = scalar_lea.sflag [#allocation5], %s304
        %s306 = sand.u32 %s127, 1
        %s307 = scalar_lea.vmem [#allocation4], %s306
        // Predicated region
        $region25: #{tpu_custom_call.1} parent=23 // pred_check
          %p308 = pneg %p81
        $region26: #{tpu_custom_call.1} parent=23 // pred_check_branch
          %310 = sbr.rel (%p308) target = $region28
        $region27: #{tpu_custom_call.1} parent=23 // pred_region
          _
        $region28: #{tpu_custom_call.1} parent=23 // pred_fallthru
          _
        // Predicated region
        $region29: #{tpu_custom_call.1} parent=23 // pred_check
          %p311 = pneg %p109
        $region30: #{tpu_custom_call.1} parent=23 // pred_check_branch
          %313 = sbr.rel (%p311) target = $region32
        $region31: #{tpu_custom_call.1} parent=23 // pred_region
          %s315 = ssub.s32 16, 16
          %316 = vsyncadd %s301, %s315
          %s317 = sadd.s32 %s26, %s25
          %s318 = smul.addr %s317, 16
          %s319 = scalar_lea.hbm %s2, %s318
          %s321 = sshll.u32 %s303, 4
          %s322 = int_to_ptr.vmem [resolvable:$true] %s321
          %324 = dma.vmem_to_hbm [thread:$0]  %s322, 16, %s319, %s301
        $region32: #{tpu_custom_call.1} parent=23 // pred_fallthru
          _
        // Predicated region
        $region33: #{tpu_custom_call.1} parent=23 // pred_check
          %p325 = pneg %p137
        $region34: #{tpu_custom_call.1} parent=23 // pred_check_branch
          %327 = sbr.rel (%p325) target = $region36
        $region35: #{tpu_custom_call.1} parent=23 // pred_region
          %s329 = ssub.s32 16, 16
          %330 = vsyncadd %s305, %s329
          %s331 = sadd.s32 %s26, %s25
          %s332 = smul.addr %s331, 16
          %s333 = scalar_lea.hbm %s3, %s332
          %s335 = sshll.u32 %s307, 4
          %s336 = int_to_ptr.vmem [resolvable:$true] %s335
          %338 = dma.vmem_to_hbm [thread:$0]  %s336, 16, %s333, %s305
        $region36: #{tpu_custom_call.1} parent=23 // pred_fallthru
          _
      $region24: #{tpu_custom_call.1} parent=5 // pred_fallthru
        _
      %p339 = scmp.le.s32.totalorder 2, %s16
      // Predicated region
      $region37: #{tpu_custom_call.1} parent=5 // pred_check
        %p340 = pneg %p339
      $region38: #{tpu_custom_call.1} parent=5 // pred_check_branch
        %342 = sbr.rel (%p340) target = $region40
      $region39: #{tpu_custom_call.1} parent=5 // pred_region
        %s343 = ssub.s32 %s16, 2
        // Predicated region
        $region41: #{tpu_custom_call.1} parent=39 // pred_check
          %p344 = pneg %p87
        $region42: #{tpu_custom_call.1} parent=39 // pred_check_branch
          %346 = sbr.rel (%p344) target = $region44
        $region43: #{tpu_custom_call.1} parent=39 // pred_region
          %p347 = scmp.lt.s32.totalorder %s27, 1
          %s348 = scalar_select %p347, %s27, 1
          %p349 = scmp.lt.s32.totalorder %s28, 0
          %s350 = scalar_select %p349, %s28, 0
          %s351 = smul.addr %s348, 4
          %s352 = sadd.s32 %s350, %s351
          %s353 = smul.addr %s352, 8
          %s354 = scalar_lea.vmem %s1, %s353
        $region44: #{tpu_custom_call.1} parent=39 // pred_fallthru
          _
        // Predicated region
        $region45: #{tpu_custom_call.1} parent=39 // pred_check
          %p355 = pneg %p115
        $region46: #{tpu_custom_call.1} parent=39 // pred_check_branch
          %357 = sbr.rel (%p355) target = $region48
        $region47: #{tpu_custom_call.1} parent=39 // pred_region
          %s358 = sand.u32 %s100, 1
          %s359 = scalar_lea.sflag [#allocation3], %s358
          %s360 = sand.u32 %s100, 1
          %s361 = scalar_lea.vmem [#allocation2], %s360
          %362 = dma.done %s359, 16
        $region48: #{tpu_custom_call.1} parent=39 // pred_fallthru
          _
        // Predicated region
        $region49: #{tpu_custom_call.1} parent=39 // pred_check
          %p363 = pneg %p143
        $region50: #{tpu_custom_call.1} parent=39 // pred_check_branch
          %365 = sbr.rel (%p363) target = $region52
        $region51: #{tpu_custom_call.1} parent=39 // pred_region
          %s366 = sand.u32 %s128, 1
          %s367 = scalar_lea.sflag [#allocation5], %s366
          %s368 = sand.u32 %s128, 1
          %s369 = scalar_lea.vmem [#allocation4], %s368
          %370 = dma.done %s367, 16
        $region52: #{tpu_custom_call.1} parent=39 // pred_fallthru
          _
      $region40: #{tpu_custom_call.1} parent=5 // pred_fallthru
        _
    $region6: #{tpu_custom_call.1} parent=1 // loop_footer
      %s20 = sadd.s32 1, %s16
    $region7: #{tpu_custom_call.1} parent=1 // loop_footer_branch
      %15 = sbr.rel target = $region3
    $region8: #{tpu_custom_call.1} parent=1 // loop_exit
      _
    %371 = vsyncpa [#allocation3], 1
    %s372 = scalar_lea.sflag [#allocation3], 1
    %373 = vsyncpa %s372, 1
    %374 = vsyncpa [#allocation5], 1
    %s375 = scalar_lea.sflag [#allocation5], 1
    %376 = vsyncpa %s375, 1

</llo_original>
